<compile_context>
chip_gen: v6e
topology: v6e:2x2x1
jax: 0.10.0
libtpu: 0.0.40
codegen_flags: <defaults>
</compile_context>

<pallas_src>
import jax
import jax.numpy as jnp
from jax.experimental import pallas as pl
from jax.experimental.pallas import tpu as pltpu

EPS = 1e-6


def _l2norm(x):
    # x / ||x||_2 over the hidden axis; rsqrt -> EUP slot, cross-lane sum -> XLU.
    return x * jax.lax.rsqrt(jnp.sum(x * x, axis=-1, keepdims=True) + EPS)


def _round_up(n, m):
    return ((n + m - 1) // m) * m


def _cdiv(a, b):
    return -(-a // b)


# ----------------------------------------------------------------------------
# Kernel
# ----------------------------------------------------------------------------
def ngpt_block_kernel(x_ref, w1_ref, b1_ref, w2_ref, b2_ref, alpha_ref,
                      o_ref, acc_ref):
    f = pl.program_id(1)

    @pl.when(f == 0)
    def _():
        acc_ref[...] = jnp.zeros_like(acc_ref)

    # ---- module: MLP chunk over the F (intermediate) dimension --------------
    x = x_ref[...]                                                     # (tm, H)
    h = jnp.dot(x, w1_ref[...], preferred_element_type=jnp.float32)    # (tm, tf)
    h = h + b1_ref[...].astype(jnp.float32)
    h = h * jax.nn.sigmoid(h)                                          # SiLU (EUP)
    acc_ref[...] += jnp.dot(h.astype(w2_ref.dtype), w2_ref[...],
                            preferred_element_type=jnp.float32)        # (tm, H)

    # ---- epilogue on the last F chunk: norms / residual / scale -------------
    @pl.when(f == pl.num_programs(1) - 1)
    def _():
        xf = x.astype(jnp.float32)
        out = acc_ref[...] + b2_ref[...].astype(jnp.float32)
        out = _l2norm(out)                                  # post_norm
        out = out - xf                                      # out - input
        out = out * alpha_ref[...].astype(jnp.float32)      # scale (alpha)
        out = xf + out                                      # input + dropout(out); p=0
        out = _l2norm(out)                                  # skip_norm
        o_ref[...] = out.astype(o_ref.dtype)


# ----------------------------------------------------------------------------
# Tiling / VMEM budgeting
# ----------------------------------------------------------------------------
def _vmem_capacity_bytes():
    cap = 64 * 1024 * 1024          # conservative default (v7x per-TensorCore)
    try:
        info = pltpu.get_tpu_info()
        c = getattr(info, "vmem_capacity_bytes", None)
        if callable(c):
            c = c()
        if c:
            cap = int(c)
    except Exception:
        pass
    return cap


def _footprint_terms(tf, H, x_bytes, w_bytes):
    # fixed: W1/W2 chunks (double-buffered) + b1 chunk + b2 + alpha (double-buffered)
    fixed = (4 * H * tf + 2 * tf + 4 * H) * w_bytes
    # per token row: x + out tiles (double-buffered), f32 accumulator scratch,
    # epilogue f32 temporaries (~3x (tm,H) f32), SiLU intermediate (f32 + cast).
    per_row = 4 * H * x_bytes + 16 * H + tf * (4 + w_bytes)
    return fixed, per_row


def _max_tm_for(budget, tf, H, x_bytes, w_bytes, granule):
    fixed, per_row = _footprint_terms(tf, H, x_bytes, w_bytes)
    avail = budget - fixed - (2 << 20)          # small fixed slack
    if avail <= 0:
        return 0
    return max(0, (avail // per_row) // granule * granule)


def _choose_tiles(M_pad, H, F, x_bytes, w_bytes, budget, granule, max_tm=1024):
    # Cap tm so (a) it never exceeds the (granule-rounded) token count and
    # (b) there are >= 2 token tiles, so both v7x TensorCores get work on the
    # "parallel" axis.
    tm_upper = min(max_tm,
                   _round_up(M_pad, granule),
                   max(granule, _round_up(_cdiv(M_pad, 2), granule)))

    # Weight-resident fast path: single F chunk -> W1/W2 block indices are
    # invariant over the whole grid, so weights are DMA'd from HBM exactly once.
    tm_res = _max_tm_for(budget, F, H, x_bytes, w_bytes, granule)
    if tm_res >= min(tm_upper, 256):
        return min(tm_res, tm_upper), F

    # Streaming path: tile F as a reduction axis. Keep tf a multiple of 256
    # (v6e/v7x 256x256 MXU tile) when possible; never fall back to tf = F.
    tf = None
    for cand in (512, 256, 128):
        if F % cand == 0:
            tf = cand
            break
    if tf is None:
        tf = 256        # F will be zero-padded to a multiple of tf (exact math)
    tm = max(granule, min(_max_tm_for(budget, tf, H, x_bytes, w_bytes, granule),
                          tm_upper))
    return tm, tf


# ----------------------------------------------------------------------------
# Wrapper
# ----------------------------------------------------------------------------
def ngpt_block(x, w1, b1, w2, b2, alpha, *, tm=None, tf=None):
    """x: (B, S, H) -> (B, S, H). Weights: w1 (H,F), b1 (1,F), w2 (F,H), b2 (1,H), alpha (1,H)."""
    B, S, H = x.shape
    F = w1.shape[1]
    M = B * S

    b1 = jnp.asarray(b1).reshape(1, F)
    b2 = jnp.asarray(b2).reshape(1, H)
    alpha = jnp.asarray(alpha).reshape(1, H)

    x_bytes = jnp.dtype(x.dtype).itemsize
    w_bytes = jnp.dtype(w1.dtype).itemsize
    granule = max(8, 32 // max(x_bytes, 1))      # 8 rows f32, 16 rows bf16

    vmem_cap = _vmem_capacity_bytes()
    vmem_limit = min(int(vmem_cap * 0.85), vmem_cap - (8 << 20))   # ~54 MiB v7x, ~108 MiB v5e/v6e
    budget = vmem_limit - (4 << 20)

    # Pad the token axis only to the sublane granule (tiny); tile-level
    # raggedness is handled by Pallas partial blocks (masked stores).
    M_pad = _round_up(M, granule)

    auto_tm, auto_tf = _choose_tiles(M_pad, H, F, x_bytes, w_bytes, budget, granule)
    tm = auto_tm if tm is None else max(granule, _round_up(min(tm, M_pad), granule))
    tf = auto_tf if tf is None else tf

    # Zero-pad F only if tf does not divide it (zero cols/rows are exact).
    F_pad = F if tf == F else _round_up(F, tf)
    if F_pad != F:
        w1 = jnp.pad(w1, ((0, 0), (0, F_pad - F)))
        b1 = jnp.pad(b1, ((0, 0), (0, F_pad - F)))
        w2 = jnp.pad(w2, ((0, F_pad - F), (0, 0)))

    x2 = x.reshape(M, H)
    if M_pad != M:
        x2 = jnp.pad(x2, ((0, M_pad - M), (0, 0)))

    n_tok = _cdiv(M_pad, tm)      # "parallel": shards across v7x's 2 TensorCores
    n_f = F_pad // tf             # "arbitrary": sequential F reduction

    weight_streams = 1 if n_f == 1 else n_tok
    cost = pl.CostEstimate(
        flops=4 * M_pad * H * F_pad,                       # two matmuls
        transcendentals=M_pad * F_pad + 2 * M_pad,         # sigmoid exp + rsqrts
        bytes_accessed=(2 * M_pad * H) * x_bytes
        + weight_streams * (w1.size + w2.size + b1.size) * w_bytes
        + (b2.size + alpha.size) * w_bytes,
    )

    out = pl.pallas_call(
        ngpt_block_kernel,
        out_shape=jax.ShapeDtypeStruct((M_pad, H), x.dtype),
        grid_spec=pltpu.PrefetchScalarGridSpec(
            num_scalar_prefetch=0,
            grid=(n_tok, n_f),
            in_specs=[
                pl.BlockSpec((tm, H), lambda i, f: (i, 0)),   # x tile (revisited over f)
                pl.BlockSpec((H, tf), lambda i, f: (0, f)),   # W1 chunk (invariant if n_f==1)
                pl.BlockSpec((1, tf), lambda i, f: (0, f)),   # b1 chunk
                pl.BlockSpec((tf, H), lambda i, f: (f, 0)),   # W2 chunk
                pl.BlockSpec((1, H), lambda i, f: (0, 0)),    # b2
                pl.BlockSpec((1, H), lambda i, f: (0, 0)),    # alpha
            ],
            out_specs=pl.BlockSpec((tm, H), lambda i, f: (i, 0)),
            scratch_shapes=[pltpu.VMEM((tm, H), jnp.float32)],  # f32 accumulator
        ),
        compiler_params=pltpu.CompilerParams(
            dimension_semantics=("parallel", "arbitrary"),
            vmem_limit_bytes=int(vmem_limit),
        ),
        cost_estimate=cost,
    )(x2, w1, b1, w2, b2, alpha)

    if M_pad != M:
        out = out[:M]
    return out.reshape(B, S, H)


def ngpt_block_ref(x, w1, b1, w2, b2, alpha):
    """Pure-JAX reference mirroring the PyTorch forward (all math in f32)."""
    xf = x.astype(jnp.float32)
    h = xf @ w1.astype(jnp.float32) + b1.astype(jnp.float32)
    h = h * jax.nn.sigmoid(h)
    out = h @ w2.astype(jnp.float32) + b2.astype(jnp.float32)
    out = _l2norm(out)
    out = out - xf
    out = out * alpha.astype(jnp.float32)
    out = xf + out
    out = _l2norm(out)
    return out.astype(x.dtype)


if __name__ == "__main__":
    # TODO(synk): the PyTorch class is a generic wrapper; only the MLP + L2-norm
    # + scale + dropout(p=0) instantiation is implemented here.
    B, S, H, F = 2, 8, 128, 256     # small, lane-aligned demo shapes

    key = jax.random.PRNGKey(0)
    kx, k1, k2, k3, k4, k5, kr = jax.random.split(key, 7)

    x = jax.random.normal(kx, (B, S, H), dtype=jnp.float32)
    w1 = jax.random.normal(k1, (H, F), dtype=jnp.float32) * (1.0 / H ** 0.5)
    b1 = jax.random.normal(k2, (1, F), dtype=jnp.float32) * 0.01
    w2 = jax.random.normal(k3, (F, H), dtype=jnp.float32) * (1.0 / F ** 0.5)
    b2 = jax.random.normal(k4, (1, H), dtype=jnp.float32) * 0.01
    alpha = 0.05 + 0.01 * jax.random.normal(k5, (1, H), dtype=jnp.float32)

    # 1) f32, auto tiles (weight-resident path, n_f == 1)
    out = jax.block_until_ready(ngpt_block(x, w1, b1, w2, b2, alpha))
    ref = ngpt_block_ref(x, w1, b1, w2, b2, alpha)
    assert out.shape == (B, S, H)
    assert jnp.allclose(out, ref, atol=1e-5, rtol=1e-5), "f32 mismatch vs reference"

    # 2) ragged token count (M=21): granule padding + partial final token tile
    xr = jax.random.normal(kr, (3, 7, H), dtype=jnp.float32)
    out_r = jax.block_until_ready(ngpt_block(xr, w1, b1, w2, b2, alpha))
    ref_r = ngpt_block_ref(xr, w1, b1, w2, b2, alpha)
    assert out_r.shape == (3, 7, H)
    assert jnp.allclose(out_r, ref_r, atol=1e-5, rtol=1e-5), "ragged mismatch vs reference"

    # 3) bf16 path (bf16 MXU matmuls, f32 accumulation / norms)
    bf = lambda a: a.astype(jnp.bfloat16)
    out_bf = jax.block_until_ready(
        ngpt_block(bf(x), bf(w1), bf(b1), bf(w2), bf(b2), bf(alpha)))
    ref_bf = ngpt_block_ref(bf(x), bf(w1), bf(b1), bf(w2), bf(b2), bf(alpha))
    err = jnp.max(jnp.abs(out_bf.astype(jnp.float32) - ref_bf.astype(jnp.float32)))
    assert err < 2e-2, f"bf16 mismatch vs reference: max abs err {err}"

    # 4) forced streaming path: F tiled over 2 chunks + 2 token tiles
    #    (exercises the accumulator / pl.when guards across the F reduction)
    out_s = jax.block_until_ready(ngpt_block(x, w1, b1, w2, b2, alpha, tm=8, tf=128))
    assert jnp.allclose(out_s, ref, atol=1e-5, rtol=1e-5), "streaming-path mismatch vs reference"

    print("KERNEL_OK")
</pallas_src>

<mosaic_0001>
module attributes {stable_mosaic.version = 11 : i64} {
  func.func @ngpt_block_kernel(%arg0: i32, %arg1: i32, %arg2: memref<8x128xf32, #tpu.memory_space<vmem>>, %arg3: memref<128x256xf32, #tpu.memory_space<vmem>>, %arg4: memref<1x256xf32, #tpu.memory_space<vmem>>, %arg5: memref<256x128xf32, #tpu.memory_space<vmem>>, %arg6: memref<1x128xf32, #tpu.memory_space<vmem>>, %arg7: memref<1x128xf32, #tpu.memory_space<vmem>>, %arg8: memref<8x128xf32, #tpu.memory_space<vmem>>, %arg9: memref<8x128xf32, #tpu.memory_space<vmem>>) attributes {dimension_semantics = [#tpu.dimension_semantics<parallel>, #tpu.dimension_semantics<arbitrary>], iteration_bounds = array<i64: 2, 1>, scalar_prefetch = 0 : i64, scratch_operands = 1 : i64, tpu.core_type = #tpu.core_type<tc>, window_params = [{transform_indices = @transform_0, window_bounds = array<i64: 8, 128>}, {transform_indices = @transform_1, window_bounds = array<i64: 128, 256>}, {transform_indices = @transform_2, window_bounds = array<i64: 1, 256>}, {transform_indices = @transform_3, window_bounds = array<i64: 256, 128>}, {pipeline_mode = #tpu.pipeline_mode<synchronous>, transform_indices = @transform_4, window_bounds = array<i64: 1, 128>}, {pipeline_mode = #tpu.pipeline_mode<synchronous>, transform_indices = @transform_5, window_bounds = array<i64: 1, 128>}, {transform_indices = @transform_6, window_bounds = array<i64: 8, 128>}]} {
    %c0_i32 = arith.constant 0 : i32
    %0 = arith.cmpi eq, %arg1, %c0_i32 : i32
    %1 = arith.extui %0 : i1 to i32
    %c0_i32_0 = arith.constant 0 : i32
    %2 = arith.cmpi ne, %1, %c0_i32_0 : i32
    scf.if %2 {
      %cst_16 = arith.constant 0.000000e+00 : f32
      %23 = vector.broadcast %cst_16 : f32 to vector<8x128xf32>
      %c0_17 = arith.constant 0 : index
      %c0_18 = arith.constant 0 : index
      %24 = vector.load %arg9[%c0_17, %c0_18] : memref<8x128xf32, #tpu.memory_space<vmem>>, vector<8x128xf32>
      tpu.vector_store %arg9[%c0_17, %c0_18], %23 {strides = array<i32>} : memref<8x128xf32, #tpu.memory_space<vmem>>, vector<8x128xf32>,
    } else {
    }
    %c0 = arith.constant 0 : index
    %c0_1 = arith.constant 0 : index
    %3 = vector.load %arg2[%c0, %c0_1] : memref<8x128xf32, #tpu.memory_space<vmem>>, vector<8x128xf32>
    %c0_2 = arith.constant 0 : index
    %c0_3 = arith.constant 0 : index
    %4 = vector.load %arg3[%c0_2, %c0_3] : memref<128x256xf32, #tpu.memory_space<vmem>>, vector<128x256xf32>
    %cst = arith.constant dense<0.000000e+00> : vector<8x256xf32>
    %5 = tpu.matmul %3, %4, %cst {dimension_numbers = #tpu.dot_dimension_numbers<[1], [0], [0], [1], [0, 0, 1, 1], [], []>} : vector<8x128xf32>, vector<128x256xf32>, vector<8x256xf32> -> vector<8x256xf32>
    %c0_4 = arith.constant 0 : index
    %c0_5 = arith.constant 0 : index
    %6 = vector.load %arg4[%c0_4, %c0_5] : memref<1x256xf32, #tpu.memory_space<vmem>>, vector<1x256xf32>
    %7 = vector.broadcast %6 : vector<1x256xf32> to vector<8x256xf32>
    %8 = arith.addf %5, %7 : vector<8x256xf32>
    %9 = arith.negf %8 : vector<8x256xf32>
    %10 = math.exp %9 : vector<8x256xf32>
    %cst_6 = arith.constant 1.000000e+00 : f32
    %11 = vector.broadcast %cst_6 : f32 to vector<8x256xf32>
    %12 = arith.addf %11, %10 : vector<8x256xf32>
    %13 = arith.divf %11, %12 : vector<8x256xf32>
    %14 = arith.mulf %8, %13 : vector<8x256xf32>
    %c0_7 = arith.constant 0 : index
    %c0_8 = arith.constant 0 : index
    %15 = vector.load %arg9[%c0_7, %c0_8] : memref<8x128xf32, #tpu.memory_space<vmem>>, vector<8x128xf32>
    %c0_9 = arith.constant 0 : index
    %c0_10 = arith.constant 0 : index
    %16 = vector.load %arg5[%c0_9, %c0_10] : memref<256x128xf32, #tpu.memory_space<vmem>>, vector<256x128xf32>
    %cst_11 = arith.constant dense<0.000000e+00> : vector<8x128xf32>
    %17 = tpu.matmul %14, %16, %cst_11 {dimension_numbers = #tpu.dot_dimension_numbers<[1], [0], [0], [1], [0, 0, 1, 1], [], []>} : vector<8x256xf32>, vector<256x128xf32>, vector<8x128xf32> -> vector<8x128xf32>
    %18 = arith.addf %15, %17 : vector<8x128xf32>
    %c0_12 = arith.constant 0 : index
    %c0_13 = arith.constant 0 : index
    %19 = vector.load %arg9[%c0_12, %c0_13] : memref<8x128xf32, #tpu.memory_space<vmem>>, vector<8x128xf32>
    tpu.vector_store %arg9[%c0_12, %c0_13], %18 {strides = array<i32>} : memref<8x128xf32, #tpu.memory_space<vmem>>, vector<8x128xf32>,
    %c0_i32_14 = arith.constant 0 : i32
    %20 = arith.cmpi eq, %arg1, %c0_i32_14 : i32
    %21 = arith.extui %20 : i1 to i32
    %c0_i32_15 = arith.constant 0 : i32
    %22 = arith.cmpi ne, %21, %c0_i32_15 : i32
    scf.if %22 {
      %c0_16 = arith.constant 0 : index
      %c0_17 = arith.constant 0 : index
      %23 = vector.load %arg9[%c0_16, %c0_17] : memref<8x128xf32, #tpu.memory_space<vmem>>, vector<8x128xf32>
      %c0_18 = arith.constant 0 : index
      %c0_19 = arith.constant 0 : index
      %24 = vector.load %arg6[%c0_18, %c0_19] : memref<1x128xf32, #tpu.memory_space<vmem>>, vector<1x128xf32>
      %25 = vector.broadcast %24 : vector<1x128xf32> to vector<8x128xf32>
      %26 = arith.addf %23, %25 : vector<8x128xf32>
      %27 = arith.mulf %26, %26 : vector<8x128xf32>
      %cst_20 = arith.constant dense<0.000000e+00> : vector<8xf32>
      %28 = vector.multi_reduction <add>, %27, %cst_20 [1] : vector<8x128xf32> to vector<8xf32>
      %29 = vector.shape_cast %28 : vector<8xf32> to vector<8x1xf32>
      %cst_21 = arith.constant 9.99999997E-7 : f32
      %30 = vector.broadcast %cst_21 : f32 to vector<8x1xf32>
      %31 = arith.addf %29, %30 : vector<8x1xf32>
      %32 = math.rsqrt %31 : vector<8x1xf32>
      %33 = vector.broadcast %32 : vector<8x1xf32> to vector<8x128xf32>
      %34 = arith.mulf %26, %33 : vector<8x128xf32>
      %35 = arith.subf %34, %3 : vector<8x128xf32>
      %c0_22 = arith.constant 0 : index
      %c0_23 = arith.constant 0 : index
      %36 = vector.load %arg7[%c0_22, %c0_23] : memref<1x128xf32, #tpu.memory_space<vmem>>, vector<1x128xf32>
      %37 = vector.broadcast %36 : vector<1x128xf32> to vector<8x128xf32>
      %38 = arith.mulf %35, %37 : vector<8x128xf32>
      %39 = arith.addf %3, %38 : vector<8x128xf32>
      %40 = arith.mulf %39, %39 : vector<8x128xf32>
      %cst_24 = arith.constant dense<0.000000e+00> : vector<8xf32>
      %41 = vector.multi_reduction <add>, %40, %cst_24 [1] : vector<8x128xf32> to vector<8xf32>
      %42 = vector.shape_cast %41 : vector<8xf32> to vector<8x1xf32>
      %cst_25 = arith.constant 9.99999997E-7 : f32
      %43 = vector.broadcast %cst_25 : f32 to vector<8x1xf32>
      %44 = arith.addf %42, %43 : vector<8x1xf32>
      %45 = math.rsqrt %44 : vector<8x1xf32>
      %46 = vector.broadcast %45 : vector<8x1xf32> to vector<8x128xf32>
      %47 = arith.mulf %39, %46 : vector<8x128xf32>
      %c0_26 = arith.constant 0 : index
      %c0_27 = arith.constant 0 : index
      %48 = vector.load %arg8[%c0_26, %c0_27] : memref<8x128xf32, #tpu.memory_space<vmem>>, vector<8x128xf32>
      tpu.vector_store %arg8[%c0_26, %c0_27], %47 {strides = array<i32>} : memref<8x128xf32, #tpu.memory_space<vmem>>, vector<8x128xf32>,
    } else {
    }
    return
  }
  func.func @transform_0(%arg0: i32, %arg1: i32) -> (i32, i32) {
    %c0_i32 = arith.constant 0 : i32
    %c0_i32_0 = arith.constant 0 : i32
    return %arg0, %c0_i32 : i32, i32
  }
  func.func @transform_1(%arg0: i32, %arg1: i32) -> (i32, i32) {
    %c0_i32 = arith.constant 0 : i32
    %c0_i32_0 = arith.constant 0 : i32
    return %c0_i32, %arg1 : i32, i32
  }
  func.func @transform_2(%arg0: i32, %arg1: i32) -> (i32, i32) {
    %c0_i32 = arith.constant 0 : i32
    %c0_i32_0 = arith.constant 0 : i32
    return %c0_i32, %arg1 : i32, i32
  }
  func.func @transform_3(%arg0: i32, %arg1: i32) -> (i32, i32) {
    %c0_i32 = arith.constant 0 : i32
    %c0_i32_0 = arith.constant 0 : i32
    return %arg1, %c0_i32 : i32, i32
  }
  func.func @transform_4(%arg0: i32, %arg1: i32) -> (i32, i32) {
    %c0_i32 = arith.constant 0 : i32
    %c0_i32_0 = arith.constant 0 : i32
    %c0_i32_1 = arith.constant 0 : i32
    return %c0_i32, %c0_i32_0 : i32, i32
  }
  func.func @transform_5(%arg0: i32, %arg1: i32) -> (i32, i32) {
    %c0_i32 = arith.constant 0 : i32
    %c0_i32_0 = arith.constant 0 : i32
    %c0_i32_1 = arith.constant 0 : i32
    return %c0_i32, %c0_i32_0 : i32, i32
  }
  func.func @transform_6(%arg0: i32, %arg1: i32) -> (i32, i32) {
    %c0_i32 = arith.constant 0 : i32
    %c0_i32_0 = arith.constant 0 : i32
    return %arg0, %c0_i32 : i32, i32
  }
}

</mosaic_0001>

<llo_original>
// kernel: tpu_custom_call.1
$region0: #{tpu_custom_call.1}
  #allocation0 [shape = 'u32[]', space=smem, size = 0x4, offset = 0x4, fixed_abs, tag = 'smem constant byte address 0x4 - core index']
  #allocation1 [shape = 'u32[144,128]{1,0:T(1,128)}', space=vmem, size = 0x12000, scoped, tag = 'internal scratch']
  #allocation2 [shape = 'f32[8,128]{1,0:T(8,128)}', space=vmem, size = 0x1000, scoped, tag = 'scratch operand']
  %s0 = inlined_call_operand.hbm [shape: f32[16,128], index: 0, kind: input, shape index: {}]
  %s1 = inlined_call_operand.hbm [shape: f32[128,256], index: 1, kind: input, shape index: {}]
  %s2 = inlined_call_operand.vmem [shape: f32[1,256], index: 2, kind: input, shape index: {}]
  %s3 = inlined_call_operand.hbm [shape: f32[256,128], index: 3, kind: input, shape index: {}]
  %s4 = inlined_call_operand.vmem [shape: f32[1,128], index: 4, kind: input, shape index: {}]
  %s5 = inlined_call_operand.vmem [shape: f32[1,128], index: 5, kind: input, shape index: {}]
  %s6 = inlined_call_operand.hbm [shape: f32[16,128], index: 6, kind: output, shape index: {}]
  %s7 = sld [smem:[#allocation0]]
  $region77: #{tpu_custom_call.1} parent=0
    _
  %s9 = ssub.s32 1, %s7
  %s10 = scalar_select 0, %s9, %s7
  $region1: #{tpu_custom_call.1} parent=0
    #allocation3 [shape = 'u8[8192]{0}', space=vmem, size = 0x2000, scoped, tag = 'input window, operand 0']
    #allocation4 [shape = 's32[2]{0}', space=sflag, size = 0x8, scoped, tag = 'scoped memory for tpu_custom_call.1']
    #allocation5 [shape = 's32[2]{0}', space=sflag, size = 0x8, scoped, tag = 'scoped memory for tpu_custom_call.1']
    #allocation6 [shape = 'u8[131072]{0}', space=vmem, size = 0x20000, scoped, tag = 'input window, operand 1, single buffered']
    #allocation7 [shape = 's32[1]{0}', space=sflag, size = 0x4, scoped, tag = 'scoped memory for tpu_custom_call.1']
    #allocation8 [shape = 'u8[131072]{0}', space=vmem, size = 0x20000, scoped, tag = 'input window, operand 3, single buffered']
    #allocation9 [shape = 'u8[8192]{0}', space=vmem, size = 0x2000, scoped, tag = 'output window, operand 0']
    %11 = vsyncpa [#allocation4], 0
    %s12 = scalar_lea.sflag [#allocation4], 1
    %13 = vsyncpa %s12, 0
    %14 = vsyncpa [#allocation7], 0
    %15 = vsyncpa [#allocation5], 0
    %s16 = scalar_lea.sflag [#allocation5], 1
    %17 = vsyncpa %s16, 0
    loop: start=0, step=1, limit=4
    $region2: #{tpu_custom_call.1} parent=1 // loop_pre_header
      _
    $region3: #{tpu_custom_call.1} parent=1 // loop_header
      %s19 = sphi 0, %s23
      %p20 = scmp.ge.s32.totalorder %s19, 4
      %s26 = sphi 0, %s38
      %s27 = sphi 0, %s34
      %s28 = sphi 0, %s26
      %s29 = sphi 0, %s27
      %s30 = sphi 0, %s28
      %s31 = sphi 0, %s29
      %s41 = sphi 0, %s43
      %s44 = sphi 0, %s41
      %s45 = sphi 0, %s44
      %s61 = sphi 0, %s45
      %s67 = sphi 0, %s69
      %s70 = sphi 0, %s67
      %s71 = sphi 0, %s70
      %s87 = sphi 0, %s71
      %s93 = sphi 0, %s95
      %s96 = sphi 0, %s93
      %s97 = sphi 0, %s96
      %s113 = sphi 0, %s97
      %s119 = sphi 0, %s121
      %s122 = sphi 0, %s119
      %s123 = sphi 0, %s122
      %s139 = sphi 0, %s123
      %s143 = sphi 0, %s143
      %s145 = sphi 0, %s143
      %s146 = sphi 0, %s145
      %s160 = sphi 0, %s146
      %s164 = sphi 0, %s164
      %s166 = sphi 0, %s164
      %s167 = sphi 0, %s166
      %s181 = sphi 0, %s167
      %s187 = sphi 0, %s189
      %s190 = sphi 0, %s187
      %s191 = sphi 0, %s190
      %s207 = sphi 0, %s191
    $region4: #{tpu_custom_call.1} parent=1 // loop_header_branch
      %22 = sbr.rel (%p20) target = $region8
    $region5: #{tpu_custom_call.1} parent=1 // loop_body
      %s24 = ssub.s32 %s19, 1
      %s25 = ssub.s32 %s19, 2
      %s32 = sadd.s32 1, %s27
      %p33 = scmp.ge.s32.totalorder %s32, 1
      %s34 = scalar_select %p33, 0, %s32
      %s35 = sadd.s32 1, %s26
      %s36 = scalar_select %p33, %s35, %s26
      %p37 = scmp.ge.s32.totalorder %s36, 2
      %s38 = scalar_select %p37, 0, %s36
      %s39 = ssub.s32 %s26, %s38
      %p40 = scmp.eq.s32.totalorder %s39, 0
      %s42 = sadd.s32 %s41, 1
      %s43 = scalar_select %p40, %s41, %s42
      %p46 = pneg %p40
      %p47 = scmp.eq.s32.totalorder %s19, 1
      %p48 = por %p46, %p47
      %p49 = scmp.ne.s32.totalorder %s41, %s44
      %p50 = scmp.eq.s32.totalorder %s19, 0
      %p51 = por %p49, %p50
      %p52 = scmp.ne.s32.totalorder %s41, %s44
      %p53 = scmp.eq.s32.totalorder %s24, 1
      %p54 = por %p52, %p53
      %p55 = scmp.ne.s32.totalorder %s44, %s45
      %p56 = scmp.eq.s32.totalorder %s24, 0
      %p57 = por %p55, %p56
      %p58 = scmp.ne.s32.totalorder %s44, %s45
      %p59 = scmp.eq.s32.totalorder %s25, 1
      %p60 = por %p58, %p59
      %p62 = scmp.ne.s32.totalorder %s45, %s61
      %p63 = scmp.eq.s32.totalorder %s25, 0
      %p64 = por %p62, %p63
      %s65 = ssub.s32 %s27, %s34
      %p66 = scmp.eq.s32.totalorder %s65, 0
      %s68 = sadd.s32 %s67, 1
      %s69 = scalar_select %p66, %s67, %s68
      %p72 = pneg %p66
      %p73 = scmp.eq.s32.totalorder %s19, 1
      %p74 = por %p72, %p73
      %p75 = scmp.ne.s32.totalorder %s67, %s70
      %p76 = scmp.eq.s32.totalorder %s19, 0
      %p77 = por %p75, %p76
      %p78 = scmp.ne.s32.totalorder %s67, %s70
      %p79 = scmp.eq.s32.totalorder %s24, 1
      %p80 = por %p78, %p79
      %p81 = scmp.ne.s32.totalorder %s70, %s71
      %p82 = scmp.eq.s32.totalorder %s24, 0
      %p83 = por %p81, %p82
      %p84 = scmp.ne.s32.totalorder %s70, %s71
      %p85 = scmp.eq.s32.totalorder %s25, 1
      %p86 = por %p84, %p85
      %p88 = scmp.ne.s32.totalorder %s71, %s87
      %p89 = scmp.eq.s32.totalorder %s25, 0
      %p90 = por %p88, %p89
      %s91 = ssub.s32 %s27, %s34
      %p92 = scmp.eq.s32.totalorder %s91, 0
      %s94 = sadd.s32 %s93, 1
      %s95 = scalar_select %p92, %s93, %s94
      %p98 = pneg %p92
      %p99 = scmp.eq.s32.totalorder %s19, 1
      %p100 = por %p98, %p99
      %p101 = scmp.ne.s32.totalorder %s93, %s96
      %p102 = scmp.eq.s32.totalorder %s19, 0
      %p103 = por %p101, %p102
      %p104 = scmp.ne.s32.totalorder %s93, %s96
      %p105 = scmp.eq.s32.totalorder %s24, 1
      %p106 = por %p104, %p105
      %p107 = scmp.ne.s32.totalorder %s96, %s97
      %p108 = scmp.eq.s32.totalorder %s24, 0
      %p109 = por %p107, %p108
      %p110 = scmp.ne.s32.totalorder %s96, %s97
      %p111 = scmp.eq.s32.totalorder %s25, 1
      %p112 = por %p110, %p111
      %p114 = scmp.ne.s32.totalorder %s97, %s113
      %p115 = scmp.eq.s32.totalorder %s25, 0
      %p116 = por %p114, %p115
      %s117 = ssub.s32 %s27, %s34
      %p118 = scmp.eq.s32.totalorder %s117, 0
      %s120 = sadd.s32 %s119, 1
      %s121 = scalar_select %p118, %s119, %s120
      %p124 = pneg %p118
      %p125 = scmp.eq.s32.totalorder %s19, 1
      %p126 = por %p124, %p125
      %p127 = scmp.ne.s32.totalorder %s119, %s122
      %p128 = scmp.eq.s32.totalorder %s19, 0
      %p129 = por %p127, %p128
      %p130 = scmp.ne.s32.totalorder %s119, %s122
      %p131 = scmp.eq.s32.totalorder %s24, 1
      %p132 = por %p130, %p131
      %p133 = scmp.ne.s32.totalorder %s122, %s123
      %p134 = scmp.eq.s32.totalorder %s24, 0
      %p135 = por %p133, %p134
      %p136 = scmp.ne.s32.totalorder %s122, %s123
      %p137 = scmp.eq.s32.totalorder %s25, 1
      %p138 = por %p136, %p137
      %p140 = scmp.ne.s32.totalorder %s123, %s139
      %p141 = scmp.eq.s32.totalorder %s25, 0
      %p142 = por %p140, %p141
      %s144 = sadd.s32 %s143, 1
      %p147 = scmp.eq.s32.totalorder %s19, 1
      %p148 = scmp.ne.s32.totalorder %s143, %s145
      %p149 = scmp.eq.s32.totalorder %s19, 0
      %p150 = por %p148, %p149
      %p151 = scmp.ne.s32.totalorder %s143, %s145
      %p152 = scmp.eq.s32.totalorder %s24, 1
      %p153 = por %p151, %p152
      %p154 = scmp.ne.s32.totalorder %s145, %s146
      %p155 = scmp.eq.s32.totalorder %s24, 0
      %p156 = por %p154, %p155
      %p157 = scmp.ne.s32.totalorder %s145, %s146
      %p158 = scmp.eq.s32.totalorder %s25, 1
      %p159 = por %p157, %p158
      %p161 = scmp.ne.s32.totalorder %s146, %s160
      %p162 = scmp.eq.s32.totalorder %s25, 0
      %p163 = por %p161, %p162
      %s165 = sadd.s32 %s164, 1
      %p168 = scmp.eq.s32.totalorder %s19, 1
      %p169 = scmp.ne.s32.totalorder %s164, %s166
      %p170 = scmp.eq.s32.totalorder %s19, 0
      %p171 = por %p169, %p170
      %p172 = scmp.ne.s32.totalorder %s164, %s166
      %p173 = scmp.eq.s32.totalorder %s24, 1
      %p174 = por %p172, %p173
      %p175 = scmp.ne.s32.totalorder %s166, %s167
      %p176 = scmp.eq.s32.totalorder %s24, 0
      %p177 = por %p175, %p176
      %p178 = scmp.ne.s32.totalorder %s166, %s167
      %p179 = scmp.eq.s32.totalorder %s25, 1
      %p180 = por %p178, %p179
      %p182 = scmp.ne.s32.totalorder %s167, %s181
      %p183 = scmp.eq.s32.totalorder %s25, 0
      %p184 = por %p182, %p183
      %s185 = ssub.s32 %s26, %s38
      %p186 = scmp.eq.s32.totalorder %s185, 0
      %s188 = sadd.s32 %s187, 1
      %s189 = scalar_select %p186, %s187, %s188
      %p192 = pneg %p186
      %p193 = scmp.eq.s32.totalorder %s19, 1
      %p194 = por %p192, %p193
      %p195 = scmp.ne.s32.totalorder %s187, %s190
      %p196 = scmp.eq.s32.totalorder %s19, 0
      %p197 = por %p195, %p196
      %p198 = scmp.ne.s32.totalorder %s187, %s190
      %p199 = scmp.eq.s32.totalorder %s24, 1
      %p200 = por %p198, %p199
      %p201 = scmp.ne.s32.totalorder %s190, %s191
      %p202 = scmp.eq.s32.totalorder %s24, 0
      %p203 = por %p201, %p202
      %p204 = scmp.ne.s32.totalorder %s190, %s191
      %p205 = scmp.eq.s32.totalorder %s25, 1
      %p206 = por %p204, %p205
      %p208 = scmp.ne.s32.totalorder %s191, %s207
      %p209 = scmp.eq.s32.totalorder %s25, 0
      %p210 = por %p208, %p209
      %p211 = scmp.le.s32.totalorder 1, %s19
      %p212 = scmp.lt.s32.totalorder %s19, 3
      %p213 = pnand %p211, %p212
      %p214 = pneg %p213
      // Predicated region
      $region9: #{tpu_custom_call.1} parent=5 // pred_check
        _
      $region10: #{tpu_custom_call.1} parent=5 // pred_check_branch
        %216 = sbr.rel (%p213) target = $region12
      $region11: #{tpu_custom_call.1} parent=5 // pred_region
        %s217 = ssub.s32 %s19, 1
        // Predicated region
        $region13: #{tpu_custom_call.1} parent=11 // pred_check
          %p218 = pneg %p83
        $region14: #{tpu_custom_call.1} parent=11 // pred_check_branch
          %220 = sbr.rel (%p218) target = $region16
        $region15: #{tpu_custom_call.1} parent=11 // pred_region
          %s221 = smul.u32 2, %s29
          %s223 = ssub.s32 4096, 4096
          %224 = vsyncadd [#allocation7], %s223
          %s225 = smul.addr %s221, 128
          %s226 = scalar_lea.hbm %s1, %s225
          %s227 = sshll.u32 [#allocation6], 4
          %s228 = int_to_ptr.vmem [resolvable:$true] %s227
          %233 = dma.hbm_to_vmem [thread:$0]  %s226, 4096, %s228, [#allocation7], 256, 256, 16
        $region16: #{tpu_custom_call.1} parent=11 // pred_fallthru
          _
        // Predicated region
        $region17: #{tpu_custom_call.1} parent=11 // pred_check
          %p234 = pneg %p109
        $region18: #{tpu_custom_call.1} parent=11 // pred_check_branch
          %236 = sbr.rel (%p234) target = $region20
        $region19: #{tpu_custom_call.1} parent=11 // pred_region
          %s237 = smul.u32 2, %s29
          %p238 = scmp.lt.s32.totalorder %s237, 1
          %s239 = scalar_select %p238, %s237, 1
          %s240 = scalar_lea.vmem %s2, %s239
          %s241 = smul.u32 2, %s29
        $region20: #{tpu_custom_call.1} parent=11 // pred_fallthru
          _
        // Predicated region
        $region21: #{tpu_custom_call.1} parent=11 // pred_check
          %p242 = pneg %p135
        $region22: #{tpu_custom_call.1} parent=11 // pred_check_branch
          %244 = sbr.rel (%p242) target = $region24
        $region23: #{tpu_custom_call.1} parent=11 // pred_region
          %s245 = smul.u32 32, %s29
          %s247 = ssub.s32 4096, 4096
          %248 = vsyncadd [#allocation7], %s247
          %s249 = smul.addr %s245, 128
          %s250 = scalar_lea.hbm %s3, %s249
          %s251 = sshll.u32 [#allocation8], 4
          %s252 = int_to_ptr.vmem [resolvable:$true] %s251
          %257 = dma.hbm_to_vmem [thread:$0]  %s250, 4096, %s252, [#allocation7], 128, 128, 8
        $region24: #{tpu_custom_call.1} parent=11 // pred_fallthru
          _
        // Predicated region
        $region25: #{tpu_custom_call.1} parent=11 // pred_check
          %p258 = pneg %p156
        $region26: #{tpu_custom_call.1} parent=11 // pred_check_branch
          %260 = sbr.rel (%p258) target = $region28
        $region27: #{tpu_custom_call.1} parent=11 // pred_region
          _
        $region28: #{tpu_custom_call.1} parent=11 // pred_fallthru
          _
        // Predicated region
        $region29: #{tpu_custom_call.1} parent=11 // pred_check
          %p261 = pneg %p177
        $region30: #{tpu_custom_call.1} parent=11 // pred_check_branch
          %263 = sbr.rel (%p261) target = $region32
        $region31: #{tpu_custom_call.1} parent=11 // pred_region
          _
        $region32: #{tpu_custom_call.1} parent=11 // pred_fallthru
          _
      $region12: #{tpu_custom_call.1} parent=5 // pred_fallthru
        _
      %p264 = scmp.lt.s32.totalorder %s19, 2
      // Predicated region
      $region33: #{tpu_custom_call.1} parent=5 // pred_check
        %p265 = pneg %p264
      $region34: #{tpu_custom_call.1} parent=5 // pred_check_branch
        %267 = sbr.rel (%p265) target = $region36
      $region35: #{tpu_custom_call.1} parent=5 // pred_region
        // Predicated region
        $region37: #{tpu_custom_call.1} parent=35 // pred_check
          %p268 = pneg %p51
        $region38: #{tpu_custom_call.1} parent=35 // pred_check_branch
          %270 = sbr.rel (%p268) target = $region40
        $region39: #{tpu_custom_call.1} parent=35 // pred_region
          %s271 = sand.u32 %s41, 1
          %s272 = scalar_lea.sflag [#allocation4], %s271
          %s273 = sand.u32 %s41, 1
          %s274 = smul.addr %s273, 8
          %s275 = scalar_lea.vmem [#allocation3], %s274
          %s277 = ssub.s32 128, 128
          %278 = vsyncadd %s272, %s277
          %s279 = smul.addr %s26, 128
          %s280 = scalar_lea.hbm %s0, %s279
          %s282 = sshll.u32 %s275, 4
          %s283 = int_to_ptr.vmem [resolvable:$true] %s282
          %285 = dma.hbm_to_vmem [thread:$0]  %s280, 128, %s283, %s272
        $region40: #{tpu_custom_call.1} parent=35 // pred_fallthru
          _
      $region36: #{tpu_custom_call.1} parent=5 // pred_fallthru
        _
      %p286 = scmp.le.s32.totalorder 1, %s19
      %p287 = scmp.lt.s32.totalorder %s19, 3
      %p288 = pnand %p286, %p287
      %p289 = pneg %p288
      // Predicated region
      $region41: #{tpu_custom_call.1} parent=5 // pred_check
        _
      $region42: #{tpu_custom_call.1} parent=5 // pred_check_branch
        %291 = sbr.rel (%p288) target = $region44
      $region43: #{tpu_custom_call.1} parent=5 // pred_region
        %s292 = ssub.s32 %s19, 1
        %s293 = sand.u32 %s44, 1
        %s294 = scalar_lea.sflag [#allocation4], %s293
        %s295 = sand.u32 %s44, 1
        %s296 = smul.addr %s295, 8
        %s297 = scalar_lea.vmem [#allocation3], %s296
        // Predicated region
        $region45: #{tpu_custom_call.1} parent=43 // pred_check
          %p298 = pneg %p57
        $region46: #{tpu_custom_call.1} parent=43 // pred_check_branch
          %300 = sbr.rel (%p298) target = $region48
        $region47: #{tpu_custom_call.1} parent=43 // pred_region
          %301 = dma.done %s294, 128
        $region48: #{tpu_custom_call.1} parent=43 // pred_fallthru
          _
        // Predicated region
        $region49: #{tpu_custom_call.1} parent=43 // pred_check
          %p302 = pneg %p83
        $region50: #{tpu_custom_call.1} parent=43 // pred_check_branch
          %304 = sbr.rel (%p302) target = $region52
        $region51: #{tpu_custom_call.1} parent=43 // pred_region
          %305 = dma.done [#allocation7], 4096
        $region52: #{tpu_custom_call.1} parent=43 // pred_fallthru
          _
        // Predicated region
        $region53: #{tpu_custom_call.1} parent=43 // pred_check
          %p306 = pneg %p135
        $region54: #{tpu_custom_call.1} parent=43 // pred_check_branch
          %308 = sbr.rel (%p306) target = $region56
        $region55: #{tpu_custom_call.1} parent=43 // pred_region
          %309 = dma.done [#allocation7], 4096
        $region56: #{tpu_custom_call.1} parent=43 // pred_fallthru
          _
        %s310 = sand.u32 %s44, 1
        %s311 = scalar_lea.sflag [#allocation4], %s310
        %s312 = sand.u32 %s44, 1
        %s313 = smul.addr %s312, 8
        %s314 = scalar_lea.vmem [#allocation3], %s313
        %p315 = pneg %p57
        %p316 = pneg %p54
        %p317 = pneg %p83
        %p318 = pneg %p80
        %s319 = smul.u32 2, %s29
        %p320 = scmp.lt.s32.totalorder %s319, 1
        %s321 = scalar_select %p320, %s319, 1
        %s322 = scalar_lea.vmem %s2, %s321
        %p323 = pneg %p109
        %p324 = pneg %p106
        %p325 = pneg %p135
        %p326 = pneg %p132
        %p327 = pneg %p156
        %p328 = pneg %p153
        %p329 = pneg %p177
        %p330 = pneg %p174
        %p331 = pneg %p203
        %p332 = pneg %p200
        %s333 = sand.u32 %s190, 1
        %s334 = scalar_lea.sflag [#allocation5], %s333
        %s335 = sand.u32 %s190, 1
        %s336 = smul.addr %s335, 8
        %s337 = scalar_lea.vmem [#allocation9], %s336
        %s338 = smul.u32 2, %s29
        %s339 = smul.u32 2, %s29
        %p340 = scmp.lt.s32.totalorder %s339, 1
        %s341 = scalar_select %p340, %s339, 1
        %s342 = scalar_lea.vmem %s2, %s341
        %s343 = smul.u32 2, %s29
        %s344 = smul.u32 32, %s29
        %p345 = scmp.eq.s32.totalorder %s29, 0
        // Predicated region
        $region57: #{tpu_custom_call.1} parent=43 // pred_check
          %p346 = pneg %p345
        $region58: #{tpu_custom_call.1} parent=43 // pred_check_branch
          %348 = sbr.rel (%p346) target = $region60
        $region59: #{tpu_custom_call.1} parent=43 // pred_region
          %349 = vst [vmem:[#allocation2] sm:$0xff] 0.0
        $region60: #{tpu_custom_call.1} parent=43 // pred_fallthru
          _
        %v350 = vld [vmem:[%s297] sm:$0xff]
        %v351 = vld [vmem:[#allocation6] sm:$0xff]
        %v352 = vld [vmem:[#allocation6 + $0x8] sm:$0xff]
        %v353 = vld [vmem:[#allocation6 + $0x10] sm:$0xff]
        %v354 = vld [vmem:[#allocation6 + $0x18] sm:$0xff]
        %v355 = vld [vmem:[#allocation6 + $0x20] sm:$0xff]
        %v356 = vld [vmem:[#allocation6 + $0x28] sm:$0xff]
        %v357 = vld [vmem:[#allocation6 + $0x30] sm:$0xff]
        %v358 = vld [vmem:[#allocation6 + $0x38] sm:$0xff]
        %v359 = vld [vmem:[#allocation6 + $0x40] sm:$0xff]
        %v360 = vld [vmem:[#allocation6 + $0x48] sm:$0xff]
        %v361 = vld [vmem:[#allocation6 + $0x50] sm:$0xff]
        %v362 = vld [vmem:[#allocation6 + $0x58] sm:$0xff]
        %v363 = vld [vmem:[#allocation6 + $0x60] sm:$0xff]
        %v364 = vld [vmem:[#allocation6 + $0x68] sm:$0xff]
        %v365 = vld [vmem:[#allocation6 + $0x70] sm:$0xff]
        %v366 = vld [vmem:[#allocation6 + $0x78] sm:$0xff]
        %v367 = vld [vmem:[#allocation6 + $0x80] sm:$0xff]
        %v368 = vld [vmem:[#allocation6 + $0x88] sm:$0xff]
        %v369 = vld [vmem:[#allocation6 + $0x90] sm:$0xff]
        %v370 = vld [vmem:[#allocation6 + $0x98] sm:$0xff]
        %v371 = vld [vmem:[#allocation6 + $0xa0] sm:$0xff]
        %v372 = vld [vmem:[#allocation6 + $0xa8] sm:$0xff]
        %v373 = vld [vmem:[#allocation6 + $0xb0] sm:$0xff]
        %v374 = vld [vmem:[#allocation6 + $0xb8] sm:$0xff]
        %v375 = vld [vmem:[#allocation6 + $0xc0] sm:$0xff]
        %v376 = vld [vmem:[#allocation6 + $0xc8] sm:$0xff]
        %v377 = vld [vmem:[#allocation6 + $0xd0] sm:$0xff]
        %v378 = vld [vmem:[#allocation6 + $0xd8] sm:$0xff]
        %v379 = vld [vmem:[#allocation6 + $0xe0] sm:$0xff]
        %v380 = vld [vmem:[#allocation6 + $0xe8] sm:$0xff]
        %v381 = vld [vmem:[#allocation6 + $0xf0] sm:$0xff]
        %v382 = vld [vmem:[#allocation6 + $0xf8] sm:$0xff]
        %v383 = vld [vmem:[%s342] sm:$0x3]
        %v385 = vlaneseq
        %v386 = vshrl.u32 %v385, 7
        %v387 = vsub.s32 0, %v386
        %v388 = vrot.slane %v383, %v387
        %v389 = vlaneseq
        %v390 = vshrl.u32 %v389, 7
        %v391 = vsub.s32 1, %v390
        %v392 = vrot.slane %v383, %v391
        %395 = vmatprep.subr.mxu0 %v382
        %396 = vmatpush1.msra.mxu0 %v381
        %397 = vmatprep.subr.mxu0 %v380
        %398 = vmatpush1.msra.mxu0 %v379
        %399 = vmatprep.subr.mxu0 %v378
        %400 = vmatpush1.msra.mxu0 %v377
        %401 = vmatprep.subr.mxu0 %v376
        %402 = vmatpush1.msra.mxu0 %v375
        %403 = vmatprep.subr.mxu0 %v374
        %404 = vmatpush1.msra.mxu0 %v373
        %405 = vmatprep.subr.mxu0 %v372
        %406 = vmatpush1.msra.mxu0 %v371
        %407 = vmatprep.subr.mxu0 %v370
        %408 = vmatpush1.msra.mxu0 %v369
        %409 = vmatprep.subr.mxu0 %v368
        %410 = vmatpush1.msra.mxu0 %v367
        %411 = vmatprep.subr.mxu0 %v366
        %412 = vmatpush1.msra.mxu0 %v365
        %413 = vmatprep.subr.mxu0 %v364
        %414 = vmatpush1.msra.mxu0 %v363
        %415 = vmatprep.subr.mxu0 %v362
        %416 = vmatpush1.msra.mxu0 %v361
        %417 = vmatprep.subr.mxu0 %v360
        %418 = vmatpush1.msra.mxu0 %v359
        %419 = vmatprep.subr.mxu0 %v358
        %420 = vmatpush1.msra.mxu0 %v357
        %421 = vmatprep.subr.mxu0 %v356
        %422 = vmatpush1.msra.mxu0 %v355
        %423 = vmatprep.subr.mxu0 %v354
        %424 = vmatpush1.msra.mxu0 %v353
        %425 = vmatprep.subr.mxu0 %v352
        %426 = vmatpush1.msra.mxu0 %v351
        %427 = vmatprep.subr.mxu0 0.0
        %428 = vmatpush2.msra.mxu0 0.0
        %429 = vmatprep.subr.mxu0 0.0
        %430 = vmatpush2.msra.mxu0 0.0
        %431 = vmatprep.subr.mxu0 0.0
        %432 = vmatpush2.msra.mxu0 0.0
        %433 = vmatprep.subr.mxu0 0.0
        %434 = vmatpush2.msra.mxu0 0.0
        %435 = vmatprep.subr.mxu0 0.0
        %436 = vmatpush2.msra.mxu0 0.0
        %437 = vmatprep.subr.mxu0 0.0
        %438 = vmatpush2.msra.mxu0 0.0
        %439 = vmatprep.subr.mxu0 0.0
        %440 = vmatpush2.msra.mxu0 0.0
        %441 = vmatprep.subr.mxu0 0.0
        %442 = vmatpush2.msra.mxu0 0.0
        %443 = vmatprep.subr.mxu0 0.0
        %444 = vmatpush2.msra.mxu0 0.0
        %445 = vmatprep.subr.mxu0 0.0
        %446 = vmatpush2.msra.mxu0 0.0
        %447 = vmatprep.subr.mxu0 0.0
        %448 = vmatpush2.msra.mxu0 0.0
        %449 = vmatprep.subr.mxu0 0.0
        %450 = vmatpush2.msra.mxu0 0.0
        %451 = vmatprep.subr.mxu0 0.0
        %452 = vmatpush2.msra.mxu0 0.0
        %453 = vmatprep.subr.mxu0 0.0
        %454 = vmatpush2.msra.mxu0 0.0
        %455 = vmatprep.subr.mxu0 0.0
        %456 = vmatpush2.msra.mxu0 0.0
        %457 = vmatprep.subr.mxu0 0.0
        %458 = vmatpush2.msra.mxu0 0.0
        %459 = vmatprep.mubr.f32.mxu0 0.0
        %460 = vmatmul.mubr.f32.gmra.mxu0 %v350
        %v461 = vpop.f32.mrf.mxu0
        %v462 = vadd.f32 %v388, %v461
        %v463 = vpop.f32.mrf.mxu0
        %v464 = vadd.f32 %v392, %v463
        %465 = vdwg.mxu0
        %v466 = vxor.u32 %v462, 2147483648
        %v467 = vxor.u32 %v464, 2147483648
        %v468 = vmul.f32 %v466, 1.442695
        %v469 = vpow.pop %v468
        %v470 = vmul.f32 %v467, 1.442695
        %v471 = vpow.pop %v470
        %v472 = vadd.f32 %v469, 1.0
        %v473 = vadd.f32 %v471, 1.0
        %v474 = vrcp.pop %v472
        %v475 = vmul.f32 1.0, %v474
        %v476 = vrcp.pop %v473
        %v477 = vmul.f32 1.0, %v476
        %v478 = vmul.f32 %v462, %v475
        %v479 = vmul.f32 %v464, %v477
        %v480 = vld [vmem:[#allocation2] sm:$0xff]
        %v481 = vld [vmem:[#allocation8] sm:$0xff]
        %v482 = vld [vmem:[#allocation8 + $0x8] sm:$0xff]
        %v483 = vld [vmem:[#allocation8 + $0x10] sm:$0xff]
        %v484 = vld [vmem:[#allocation8 + $0x18] sm:$0xff]
        %v485 = vld [vmem:[#allocation8 + $0x20] sm:$0xff]
        %v486 = vld [vmem:[#allocation8 + $0x28] sm:$0xff]
        %v487 = vld [vmem:[#allocation8 + $0x30] sm:$0xff]
        %v488 = vld [vmem:[#allocation8 + $0x38] sm:$0xff]
        %v489 = vld [vmem:[#allocation8 + $0x40] sm:$0xff]
        %v490 = vld [vmem:[#allocation8 + $0x48] sm:$0xff]
        %v491 = vld [vmem:[#allocation8 + $0x50] sm:$0xff]
        %v492 = vld [vmem:[#allocation8 + $0x58] sm:$0xff]
        %v493 = vld [vmem:[#allocation8 + $0x60] sm:$0xff]
        %v494 = vld [vmem:[#allocation8 + $0x68] sm:$0xff]
        %v495 = vld [vmem:[#allocation8 + $0x70] sm:$0xff]
        %v496 = vld [vmem:[#allocation8 + $0x78] sm:$0xff]
        %v497 = vld [vmem:[#allocation8 + $0x80] sm:$0xff]
        %v498 = vld [vmem:[#allocation8 + $0x88] sm:$0xff]
        %v499 = vld [vmem:[#allocation8 + $0x90] sm:$0xff]
        %v500 = vld [vmem:[#allocation8 + $0x98] sm:$0xff]
        %v501 = vld [vmem:[#allocation8 + $0xa0] sm:$0xff]
        %v502 = vld [vmem:[#allocation8 + $0xa8] sm:$0xff]
        %v503 = vld [vmem:[#allocation8 + $0xb0] sm:$0xff]
        %v504 = vld [vmem:[#allocation8 + $0xb8] sm:$0xff]
        %v505 = vld [vmem:[#allocation8 + $0xc0] sm:$0xff]
        %v506 = vld [vmem:[#allocation8 + $0xc8] sm:$0xff]
        %v507 = vld [vmem:[#allocation8 + $0xd0] sm:$0xff]
        %v508 = vld [vmem:[#allocation8 + $0xd8] sm:$0xff]
        %v509 = vld [vmem:[#allocation8 + $0xe0] sm:$0xff]
        %v510 = vld [vmem:[#allocation8 + $0xe8] sm:$0xff]
        %v511 = vld [vmem:[#allocation8 + $0xf0] sm:$0xff]
        %v512 = vld [vmem:[#allocation8 + $0xf8] sm:$0xff]
        %513 = vmatprep.subr.mxu0 0.0
        %514 = vmatpush1.msra.mxu0 %v496
        %515 = vmatprep.subr.mxu0 0.0
        %516 = vmatpush1.msra.mxu0 %v495
        %517 = vmatprep.subr.mxu0 0.0
        %518 = vmatpush1.msra.mxu0 %v494
        %519 = vmatprep.subr.mxu0 0.0
        %520 = vmatpush1.msra.mxu0 %v493
        %521 = vmatprep.subr.mxu0 0.0
        %522 = vmatpush1.msra.mxu0 %v492
        %523 = vmatprep.subr.mxu0 0.0
        %524 = vmatpush1.msra.mxu0 %v491
        %525 = vmatprep.subr.mxu0 0.0
        %526 = vmatpush1.msra.mxu0 %v490
        %527 = vmatprep.subr.mxu0 0.0
        %528 = vmatpush1.msra.mxu0 %v489
        %529 = vmatprep.subr.mxu0 0.0
        %530 = vmatpush1.msra.mxu0 %v488
        %531 = vmatprep.subr.mxu0 0.0
        %532 = vmatpush1.msra.mxu0 %v487
        %533 = vmatprep.subr.mxu0 0.0
        %534 = vmatpush1.msra.mxu0 %v486
        %535 = vmatprep.subr.mxu0 0.0
        %536 = vmatpush1.msra.mxu0 %v485
        %537 = vmatprep.subr.mxu0 0.0
        %538 = vmatpush1.msra.mxu0 %v484
        %539 = vmatprep.subr.mxu0 0.0
        %540 = vmatpush1.msra.mxu0 %v483
        %541 = vmatprep.subr.mxu0 0.0
        %542 = vmatpush1.msra.mxu0 %v482
        %543 = vmatprep.subr.mxu0 0.0
        %544 = vmatpush1.msra.mxu0 %v481
        %545 = vmatprep.subr.mxu0 0.0
        %546 = vmatpush2.msra.mxu0 %v512
        %547 = vmatprep.subr.mxu0 0.0
        %548 = vmatpush2.msra.mxu0 %v511
        %549 = vmatprep.subr.mxu0 0.0
        %550 = vmatpush2.msra.mxu0 %v510
        %551 = vmatprep.subr.mxu0 0.0
        %552 = vmatpush2.msra.mxu0 %v509
        %553 = vmatprep.subr.mxu0 0.0
        %554 = vmatpush2.msra.mxu0 %v508
        %555 = vmatprep.subr.mxu0 0.0
        %556 = vmatpush2.msra.mxu0 %v507
        %557 = vmatprep.subr.mxu0 0.0
        %558 = vmatpush2.msra.mxu0 %v506
        %559 = vmatprep.subr.mxu0 0.0
        %560 = vmatpush2.msra.mxu0 %v505
        %561 = vmatprep.subr.mxu0 0.0
        %562 = vmatpush2.msra.mxu0 %v504
        %563 = vmatprep.subr.mxu0 0.0
        %564 = vmatpush2.msra.mxu0 %v503
        %565 = vmatprep.subr.mxu0 0.0
        %566 = vmatpush2.msra.mxu0 %v502
        %567 = vmatprep.subr.mxu0 0.0
        %568 = vmatpush2.msra.mxu0 %v501
        %569 = vmatprep.subr.mxu0 0.0
        %570 = vmatpush2.msra.mxu0 %v500
        %571 = vmatprep.subr.mxu0 0.0
        %572 = vmatpush2.msra.mxu0 %v499
        %573 = vmatprep.subr.mxu0 0.0
        %574 = vmatpush2.msra.mxu0 %v498
        %575 = vmatprep.subr.mxu0 0.0
        %576 = vmatpush2.msra.mxu0 %v497
        %577 = vmatprep.mubr.f32.mxu0 %v479
        %578 = vmatmul.mubr.f32.gmra.mxu0 %v478
        %v579 = vpop.f32.mrf.mxu0
        %v580 = vadd.f32 0.0, %v579
        %v581 = vpop.f32.mrf.mxu0
        %582 = vdwg.mxu0
        %v583 = vadd.f32 %v480, %v580
        %584 = vst [vmem:[#allocation2] sm:$0xff] %v583
        // Predicated region
        $region61: #{tpu_custom_call.1} parent=43 // pred_check
          %p585 = pneg %p345
        $region62: #{tpu_custom_call.1} parent=43 // pred_check_branch
          %587 = sbr.rel (%p585) target = $region64
        $region63: #{tpu_custom_call.1} parent=43 // pred_region
          %v588 = vld [vmem:[#allocation2] sm:$0xff]
          %v589 = vld [vmem:[%s4] sm:$0x1]
          %v591 = vlaneseq
          %v592 = vshrl.u32 %v591, 7
          %v593 = vsub.s32 0, %v592
          %v594 = vrot.slane %v589, %v593
          %v596 = vadd.f32 %v588, %v594
          %v597 = vmul.f32 %v596, %v596
          %598 = vadd.xlane.f32.xlu0 %v597
          %v599 = vpop.xlane.xlu0 %598
          %v600 = vadd.f32 %v599, 1e-06
          %v601 = vrsqrt.pop %v600
          %v602 = vmul.f32 %v596, %v601
          %v603 = vsub.f32 %v602, %v350
          %v604 = vld [vmem:[%s5] sm:$0x1]
          %v606 = vlaneseq
          %v607 = vshrl.u32 %v606, 7
          %v608 = vsub.s32 0, %v607
          %v609 = vrot.slane %v604, %v608
          %v611 = vmul.f32 %v603, %v609
          %v612 = vadd.f32 %v350, %v611
          %v613 = vmul.f32 %v612, %v612
          %614 = vadd.xlane.f32.xlu0 %v613
          %v615 = vpop.xlane.xlu0 %614
          %v616 = vadd.f32 %v615, 1e-06
          %v617 = vrsqrt.pop %v616
          %v618 = vmul.f32 %v612, %v617
          %619 = vst [vmem:[%s337] sm:$0xff] %v618
        $region64: #{tpu_custom_call.1} parent=43 // pred_fallthru
          _
        %s620 = sand.u32 %s190, 1
        %s621 = scalar_lea.sflag [#allocation5], %s620
        %s622 = sand.u32 %s190, 1
        %s623 = smul.addr %s622, 8
        %s624 = scalar_lea.vmem [#allocation9], %s623
        // Predicated region
        $region65: #{tpu_custom_call.1} parent=43 // pred_check
          %p625 = pneg %p200
        $region66: #{tpu_custom_call.1} parent=43 // pred_check_branch
          %627 = sbr.rel (%p625) target = $region68
        $region67: #{tpu_custom_call.1} parent=43 // pred_region
          %s629 = ssub.s32 128, 128
          %630 = vsyncadd %s621, %s629
          %s631 = smul.addr %s28, 128
          %s632 = scalar_lea.hbm %s6, %s631
          %s634 = sshll.u32 %s624, 4
          %s635 = int_to_ptr.vmem [resolvable:$true] %s634
          %637 = dma.vmem_to_hbm [thread:$0]  %s635, 128, %s632, %s621
        $region68: #{tpu_custom_call.1} parent=43 // pred_fallthru
          _
      $region44: #{tpu_custom_call.1} parent=5 // pred_fallthru
        _
      %p638 = scmp.le.s32.totalorder 2, %s19
      // Predicated region
      $region69: #{tpu_custom_call.1} parent=5 // pred_check
        %p639 = pneg %p638
      $region70: #{tpu_custom_call.1} parent=5 // pred_check_branch
        %641 = sbr.rel (%p639) target = $region72
      $region71: #{tpu_custom_call.1} parent=5 // pred_region
        %s642 = ssub.s32 %s19, 2
        // Predicated region
        $region73: #{tpu_custom_call.1} parent=71 // pred_check
          %p643 = pneg %p206
        $region74: #{tpu_custom_call.1} parent=71 // pred_check_branch
          %645 = sbr.rel (%p643) target = $region76
        $region75: #{tpu_custom_call.1} parent=71 // pred_region
          %s646 = sand.u32 %s191, 1
          %s647 = scalar_lea.sflag [#allocation5], %s646
          %s648 = sand.u32 %s191, 1
          %s649 = smul.addr %s648, 8
          %s650 = scalar_lea.vmem [#allocation9], %s649
          %651 = dma.done %s647, 128
        $region76: #{tpu_custom_call.1} parent=71 // pred_fallthru
          _
      $region72: #{tpu_custom_call.1} parent=5 // pred_fallthru
        _
    $region6: #{tpu_custom_call.1} parent=1 // loop_footer
      %s23 = sadd.s32 1, %s19
    $region7: #{tpu_custom_call.1} parent=1 // loop_footer_branch
      %18 = sbr.rel target = $region3
    $region8: #{tpu_custom_call.1} parent=1 // loop_exit
      _
    %652 = vsyncpa [#allocation4], 1
    %s653 = scalar_lea.sflag [#allocation4], 1
    %654 = vsyncpa %s653, 1
    %655 = vsyncpa [#allocation7], 1
    %656 = vsyncpa [#allocation5], 1
    %s657 = scalar_lea.sflag [#allocation5], 1
    %658 = vsyncpa %s657, 1

</llo_original>
